<compile_context>
chip_gen: v7x
topology: tpu7x:2x2x1
jax: 0.10.0
libtpu: 0.0.40
codegen_flags: <defaults>
</compile_context>

<pallas_src>
import functools

import jax
import jax.numpy as jnp
from jax.experimental import pallas as pl
from jax.experimental.pallas import tpu as pltpu


def _mlp_kernel(xt_ref, w_ref, bvec_ref, b3_ref, o_ref, *, z):
    """One batch tile of the 3-layer MLP, everything lane-dense.

    xt_ref:   (Z, TB)   activations^T, batch on the lane axis (mm dtype)
    w_ref:    (H, Z+H)  packed [w1^T | w2^T]                   (mm dtype)
    bvec_ref: (H, 3)    packed [b1 | b2 | w3] as columns       (f32)
    b3_ref:   (1,)      scalar output bias, SMEM               (f32)
    o_ref:    (1, TB)   lane-dense scores                      (f32)
    """
    xt = xt_ref[...]
    w1t = w_ref[:, :z]          # (H, Z)  static slice, no extra DMA
    w2t = w_ref[:, z:]          # (H, H)
    b1 = bvec_ref[:, 0:1]       # (H, 1) -> broadcast across lanes
    b2 = bvec_ref[:, 1:2]
    w3 = bvec_ref[:, 2:3]

    # Layer 1 (MXU): (H, Z) @ (Z, TB) -> f32 accumulation.
    h = jnp.dot(w1t, xt, preferred_element_type=jnp.float32)
    h = h + b1
    h = jnp.where(h > 0, h, 0.2 * h)            # LeakyReLU(0.2), f32 on the VPU

    # Layer 2 (MXU): (H, H) @ (H, TB) -> f32.
    h = jnp.dot(w2t, h.astype(w2t.dtype), preferred_element_type=jnp.float32)
    h = h + b2
    h = jnp.where(h > 0, h, 0.2 * h)

    # Layer 3: VPU multiply + sublane reduce instead of a degenerate (H,1)
    # MXU matmul; the result is already lane-dense (1, TB).
    o = jnp.sum(h * w3, axis=0, keepdims=True) + b3_ref[0]
    o_ref[...] = o.astype(o_ref.dtype)


def latent_discriminator_forward(x, params, *, block_b=256, use_bf16=False):
    """x: (B, Z) flattened latent codes. Returns (B, 1) scores (f32)."""
    w1, b1, w2, b2, w3, b3 = params
    B, Z = x.shape
    H = w1.shape[1]
    assert block_b % 128 == 0

    # Batch lives on the lane (last) axis: pad it to a multiple of 128 lanes
    # and tile it with TB (multiple of 128) so stores are unmasked / lane-dense.
    lanes = 128
    b_lane = lanes * pl.cdiv(B, lanes)
    tb = min(block_b, b_lane)
    b_pad = tb * pl.cdiv(B, tb)

    mm_dtype = jnp.bfloat16 if use_bf16 else jnp.float32

    xp = x.astype(jnp.float32)
    if b_pad != B:
        xp = jnp.pad(xp, ((0, b_pad - B), (0, 0)))
    x_t = xp.T.astype(mm_dtype)                                     # (Z, B_pad)

    # Pack parameters: 2 VMEM inputs + 1 SMEM scalar instead of 7 tiny DMAs.
    w_packed = jnp.concatenate([w1.T, w2.T], axis=1).astype(mm_dtype)  # (H, Z+H)
    bvec_packed = jnp.stack(
        [b1.astype(jnp.float32), b2.astype(jnp.float32), w3.astype(jnp.float32)],
        axis=1)                                                        # (H, 3)
    b3_smem = jnp.asarray(b3, jnp.float32).reshape(1)                  # (1,) SMEM

    flops = 2 * b_pad * (Z * H + H * H + H)
    bytes_accessed = (x_t.size * x_t.dtype.itemsize
                      + w_packed.size * w_packed.dtype.itemsize
                      + bvec_packed.size * 4 + 4
                      + b_pad * 4)

    kernel = functools.partial(_mlp_kernel, z=Z)

    out = pl.pallas_call(
        kernel,
        out_shape=jax.ShapeDtypeStruct((1, b_pad), jnp.float32),
        grid=(b_pad // tb,),
        in_specs=[
            pl.BlockSpec((Z, tb), lambda i: (0, i)),            # x^T, batch-tiled
            pl.BlockSpec((H, Z + H), lambda i: (0, 0)),         # weights, VMEM-resident
            pl.BlockSpec((H, 3), lambda i: (0, 0)),             # b1|b2|w3, VMEM-resident
            pl.BlockSpec(memory_space=pltpu.MemorySpace.SMEM),  # b3 scalar
        ],
        out_specs=pl.BlockSpec((1, tb), lambda i: (0, i)),      # lane-dense output
        compiler_params=pltpu.CompilerParams(
            dimension_semantics=("parallel",)),
        cost_estimate=pl.CostEstimate(
            flops=flops, transcendentals=0, bytes_accessed=bytes_accessed),
    )(x_t, w_packed, bvec_packed, b3_smem)

    # Wrapper-side layout plumbing back to the PyTorch (B, 1) shape.
    return out[0, :B].reshape(B, 1)


def latent_discriminator(inputs, params, *, use_bf16=False):
    """Full module: inputs.view(B, -1) then the fused MLP kernel."""
    B = inputs.shape[0]
    x = inputs.reshape(B, -1)           # equivalent of inputs.view(B, -1)
    return latent_discriminator_forward(x, params, use_bf16=use_bf16)


def init_params(key, z=32, hidden=32):
    """Deterministic synthetic parameters (shapes match MLP(z, 1, depth=3))."""
    ks = jax.random.split(key, 6)
    s = 0.05
    w1 = s * jax.random.normal(ks[0], (z, hidden), jnp.float32)
    b1 = s * jax.random.normal(ks[1], (hidden,), jnp.float32)
    w2 = s * jax.random.normal(ks[2], (hidden, hidden), jnp.float32)
    b2 = s * jax.random.normal(ks[3], (hidden,), jnp.float32)
    w3 = s * jax.random.normal(ks[4], (hidden,), jnp.float32)
    b3 = s * jax.random.normal(ks[5], (), jnp.float32)
    return (w1, b1, w2, b2, w3, b3)


def _reference(inputs, params):
    """Pure-JAX reference for sanity checking."""
    w1, b1, w2, b2, w3, b3 = params
    x = inputs.reshape(inputs.shape[0], -1)
    hp = jax.lax.Precision.HIGHEST
    h = jnp.dot(x, w1, precision=hp) + b1
    h = jnp.where(h > 0, h, 0.2 * h)
    h = jnp.dot(h, w2, precision=hp) + b2
    h = jnp.where(h > 0, h, 0.2 * h)
    return jnp.dot(h, w3.reshape(-1, 1), precision=hp) + b3


if __name__ == "__main__":
    key = jax.random.PRNGKey(0)
    k_small, k_params, k_big = jax.random.split(key, 3)

    Z = 32
    params = init_params(k_params, z=Z, hidden=32)

    # Small batch, as in the module spec (latent codes of dim z=32).
    x_small = jax.random.normal(k_small, (2, Z), jnp.float32)
    out_small = jax.block_until_ready(latent_discriminator(x_small, params))
    ref_small = _reference(x_small, params)
    assert out_small.shape == (2, 1), out_small.shape
    assert jnp.allclose(out_small, ref_small, atol=2e-3, rtol=2e-3), (out_small, ref_small)

    # Larger batch: exercises the batch grid (2 x TB=256 blocks incl. padding).
    x_big = jax.random.normal(k_big, (300, Z), jnp.float32)
    out_big = jax.block_until_ready(latent_discriminator(x_big, params))
    ref_big = _reference(x_big, params)
    assert out_big.shape == (300, 1), out_big.shape
    assert jnp.allclose(out_big, ref_big, atol=2e-3, rtol=2e-3)

    # bf16 matmul-operand path (f32 accumulation + f32 element-wise math).
    out_bf16 = jax.block_until_ready(
        latent_discriminator(x_big, params, use_bf16=True))
    assert out_bf16.shape == (300, 1), out_bf16.shape
    assert jnp.allclose(out_bf16, ref_big, atol=3e-2, rtol=3e-2)

    print("KERNEL_OK")
</pallas_src>

<mosaic_0001>
module attributes {stable_mosaic.version = 11 : i64} {
  func.func @_mlp_kernel(%arg0: i32, %arg1: memref<32x128xf32, #tpu.memory_space<vmem>>, %arg2: memref<32x64xf32, #tpu.memory_space<vmem>>, %arg3: memref<32x3xf32, #tpu.memory_space<vmem>>, %arg4: memref<1xf32, #tpu.memory_space<smem>>, %arg5: memref<1x128xf32, #tpu.memory_space<vmem>>) attributes {dimension_semantics = [#tpu.dimension_semantics<parallel>], iteration_bounds = array<i64: 1>, scalar_prefetch = 0 : i64, scratch_operands = 0 : i64, tpu.core_type = #tpu.core_type<tc>, window_params = [{transform_indices = @transform_0, window_bounds = array<i64: 32, 128>}, {pipeline_mode = #tpu.pipeline_mode<synchronous>, transform_indices = @transform_1, window_bounds = array<i64: 32, 64>}, {pipeline_mode = #tpu.pipeline_mode<synchronous>, transform_indices = @transform_2, window_bounds = array<i64: 32, 3>}, {transform_indices = @transform_3, window_bounds = array<i64: 1>}, {transform_indices = @transform_4, window_bounds = array<i64: 1, 128>}]} {
    %c0 = arith.constant 0 : index
    %c0_0 = arith.constant 0 : index
    %0 = vector.load %arg1[%c0, %c0_0] : memref<32x128xf32, #tpu.memory_space<vmem>>, vector<32x128xf32>
    %c0_1 = arith.constant 0 : index
    %c0_2 = arith.constant 0 : index
    %1 = vector.load %arg2[%c0_1, %c0_2] : memref<32x64xf32, #tpu.memory_space<vmem>>, vector<32x32xf32>
    %c0_3 = arith.constant 0 : index
    %c32 = arith.constant 32 : index
    %2 = vector.load %arg2[%c0_3, %c32] : memref<32x64xf32, #tpu.memory_space<vmem>>, vector<32x32xf32>
    %c0_4 = arith.constant 0 : index
    %c0_5 = arith.constant 0 : index
    %3 = vector.load %arg3[%c0_4, %c0_5] : memref<32x3xf32, #tpu.memory_space<vmem>>, vector<32x1xf32>
    %c0_6 = arith.constant 0 : index
    %c1 = arith.constant 1 : index
    %4 = vector.load %arg3[%c0_6, %c1] : memref<32x3xf32, #tpu.memory_space<vmem>>, vector<32x1xf32>
    %c0_7 = arith.constant 0 : index
    %c2 = arith.constant 2 : index
    %5 = vector.load %arg3[%c0_7, %c2] : memref<32x3xf32, #tpu.memory_space<vmem>>, vector<32x1xf32>
    %cst = arith.constant dense<0.000000e+00> : vector<32x128xf32>
    %6 = tpu.matmul %1, %0, %cst {dimension_numbers = #tpu.dot_dimension_numbers<[1], [0], [0], [1], [0, 0, 1, 1], [], []>} : vector<32x32xf32>, vector<32x128xf32>, vector<32x128xf32> -> vector<32x128xf32>
    %7 = vector.broadcast %3 : vector<32x1xf32> to vector<32x128xf32>
    %8 = arith.addf %6, %7 : vector<32x128xf32>
    %cst_8 = arith.constant 0.000000e+00 : f32
    %9 = vector.broadcast %cst_8 : f32 to vector<32x128xf32>
    %10 = arith.cmpf ogt, %8, %9 : vector<32x128xf32>
    %cst_9 = arith.constant 2.000000e-01 : f32
    %11 = vector.broadcast %cst_9 : f32 to vector<32x128xf32>
    %12 = arith.mulf %11, %8 : vector<32x128xf32>
    %13 = arith.select %10, %8, %12 : vector<32x128xi1>, vector<32x128xf32>
    %cst_10 = arith.constant dense<0.000000e+00> : vector<32x128xf32>
    %14 = tpu.matmul %2, %13, %cst_10 {dimension_numbers = #tpu.dot_dimension_numbers<[1], [0], [0], [1], [0, 0, 1, 1], [], []>} : vector<32x32xf32>, vector<32x128xf32>, vector<32x128xf32> -> vector<32x128xf32>
    %15 = vector.broadcast %4 : vector<32x1xf32> to vector<32x128xf32>
    %16 = arith.addf %14, %15 : vector<32x128xf32>
    %cst_11 = arith.constant 0.000000e+00 : f32
    %17 = vector.broadcast %cst_11 : f32 to vector<32x128xf32>
    %18 = arith.cmpf ogt, %16, %17 : vector<32x128xf32>
    %cst_12 = arith.constant 2.000000e-01 : f32
    %19 = vector.broadcast %cst_12 : f32 to vector<32x128xf32>
    %20 = arith.mulf %19, %16 : vector<32x128xf32>
    %21 = arith.select %18, %16, %20 : vector<32x128xi1>, vector<32x128xf32>
    %22 = vector.broadcast %5 : vector<32x1xf32> to vector<32x128xf32>
    %23 = arith.mulf %21, %22 : vector<32x128xf32>
    %cst_13 = arith.constant dense<0.000000e+00> : vector<128xf32>
    %24 = vector.multi_reduction <add>, %23, %cst_13 [0] : vector<32x128xf32> to vector<128xf32>
    %25 = vector.shape_cast %24 : vector<128xf32> to vector<1x128xf32>
    %c0_14 = arith.constant 0 : index
    %26 = memref.load %arg4[%c0_14] : memref<1xf32, #tpu.memory_space<smem>>
    %27 = vector.broadcast %26 : f32 to vector<1x128xf32>
    %28 = arith.addf %25, %27 : vector<1x128xf32>
    %c0_15 = arith.constant 0 : index
    %c0_16 = arith.constant 0 : index
    %29 = vector.load %arg5[%c0_15, %c0_16] : memref<1x128xf32, #tpu.memory_space<vmem>>, vector<1x128xf32>
    tpu.vector_store %arg5[%c0_15, %c0_16], %28 {strides = array<i32>} : memref<1x128xf32, #tpu.memory_space<vmem>>, vector<1x128xf32>,
    return
  }
  func.func @transform_0(%arg0: i32) -> (i32, i32) {
    %c0_i32 = arith.constant 0 : i32
    %c0_i32_0 = arith.constant 0 : i32
    return %c0_i32, %arg0 : i32, i32
  }
  func.func @transform_1(%arg0: i32) -> (i32, i32) {
    %c0_i32 = arith.constant 0 : i32
    %c0_i32_0 = arith.constant 0 : i32
    %c0_i32_1 = arith.constant 0 : i32
    return %c0_i32, %c0_i32_0 : i32, i32
  }
  func.func @transform_2(%arg0: i32) -> (i32, i32) {
    %c0_i32 = arith.constant 0 : i32
    %c0_i32_0 = arith.constant 0 : i32
    %c0_i32_1 = arith.constant 0 : i32
    return %c0_i32, %c0_i32_0 : i32, i32
  }
  func.func @transform_3(%arg0: i32) -> i32 {
    %c0_i32 = arith.constant 0 : i32
    %c0_i32_0 = arith.constant 0 : i32
    return %c0_i32 : i32
  }
  func.func @transform_4(%arg0: i32) -> (i32, i32) {
    %c0_i32 = arith.constant 0 : i32
    %c0_i32_0 = arith.constant 0 : i32
    return %c0_i32, %arg0 : i32, i32
  }
}

</mosaic_0001>

<llo_original>
// kernel: tpu_custom_call.1
$region0: #{tpu_custom_call.1}
  #allocation0 [shape = 'u32[]', space=smem, size = 0x4, offset = 0x4, fixed_abs, tag = 'smem constant byte address 0x4 - core index']
  #allocation1 [shape = 'u32[144,128]{1,0:T(1,128)}', space=vmem, size = 0x12000, scoped, tag = 'internal scratch']
  #allocation2 [shape = 'f32[1]{0:T(128)S(6)}', space=smem, size = 0x200, scoped, tag = 'scoped memory for tpu_custom_call.1']
  %s0 = inlined_call_operand.vmem [shape: f32[32,128], index: 0, kind: input, shape index: {}]
  %s1 = inlined_call_operand.hbm [shape: f32[32,64], index: 1, kind: input, shape index: {}]
  %s2 = inlined_call_operand.vmem [shape: f32[32,3], index: 2, kind: input, shape index: {}]
  %s3 = inlined_call_operand.<no memory space> [shape: f32[1], index: 3, kind: input, shape index: {}]
  %s4 = inlined_call_operand.hbm [shape: f32[1,128], index: 4, kind: output, shape index: {}]
  %s5 = sld [smem:[#allocation0]]
  $region30: #{tpu_custom_call.1} parent=0
    _
  %s7 = ssub.s32 1, %s5
  %s8 = scalar_select 0, %s7, %s5
  %9 = sst [smem:[#allocation2]] %s3
  $region1: #{tpu_custom_call.1} parent=0
    #allocation3 [shape = 'u8[16384]{0}', space=vmem, size = 0x4000, scoped, tag = 'input window, operand 1, single buffered']
    #allocation4 [shape = 's32[1]{0}', space=sflag, size = 0x4, scoped, tag = 'scoped memory for tpu_custom_call.1']
    #allocation5 [shape = 's32[1]{0}', space=sflag, size = 0x4, scoped, tag = 'scoped memory for tpu_custom_call.1']
    #allocation6 [shape = 'u8[512]{0}', space=vmem, size = 0x400, scoped, tag = 'output window, operand 0, single buffered']
    %10 = vsyncpa [#allocation4], 0
    %11 = vsyncpa [#allocation5], 0
    // Predicated region
    $region2: #{tpu_custom_call.1} parent=1 // pred_check
      _
    $region3: #{tpu_custom_call.1} parent=1 // pred_check_branch
      %13 = sbr.rel (0) target = $region5
    $region4: #{tpu_custom_call.1} parent=1 // pred_region
      _
    $region5: #{tpu_custom_call.1} parent=1 // pred_fallthru
      _
    // Predicated region
    $region6: #{tpu_custom_call.1} parent=1 // pred_check
      _
    $region7: #{tpu_custom_call.1} parent=1 // pred_check_branch
      %15 = sbr.rel (0) target = $region9
    $region8: #{tpu_custom_call.1} parent=1 // pred_region
      %s17 = ssub.s32 512, 512
      %18 = vsyncadd [#allocation4], %s17
      %s19 = sshll.u32 [#allocation3], 4
      %s20 = int_to_ptr.vmem [resolvable:$true] %s19
      %25 = dma.hbm_to_vmem [thread:$0]  %s1, 512, %s20, [#allocation4], 128, 128, 8
    $region9: #{tpu_custom_call.1} parent=1 // pred_fallthru
      _
    // Predicated region
    $region10: #{tpu_custom_call.1} parent=1 // pred_check
      _
    $region11: #{tpu_custom_call.1} parent=1 // pred_check_branch
      %27 = sbr.rel (0) target = $region13
    $region12: #{tpu_custom_call.1} parent=1 // pred_region
      _
    $region13: #{tpu_custom_call.1} parent=1 // pred_fallthru
      _
    // Predicated region
    $region14: #{tpu_custom_call.1} parent=1 // pred_check
      _
    $region15: #{tpu_custom_call.1} parent=1 // pred_check_branch
      %29 = sbr.rel (0) target = $region17
    $region16: #{tpu_custom_call.1} parent=1 // pred_region
      _
    $region17: #{tpu_custom_call.1} parent=1 // pred_fallthru
      _
    // Predicated region
    $region18: #{tpu_custom_call.1} parent=1 // pred_check
      _
    $region19: #{tpu_custom_call.1} parent=1 // pred_check_branch
      %31 = sbr.rel (0) target = $region21
    $region20: #{tpu_custom_call.1} parent=1 // pred_region
      %32 = dma.done [#allocation4], 512
    $region21: #{tpu_custom_call.1} parent=1 // pred_fallthru
      _
    %v33 = vld [vmem:[%s0] sm:$0xff]
    %v34 = vld [vmem:[%s0 + $0x8] sm:$0xff]
    %v35 = vld [vmem:[%s0 + $0x10] sm:$0xff]
    %v36 = vld [vmem:[%s0 + $0x18] sm:$0xff]
    %v37 = vld [vmem:[#allocation3] sm:$0xff]
    %v38 = vld [vmem:[#allocation3 + $0x8] sm:$0xff]
    %v39 = vld [vmem:[#allocation3 + $0x10] sm:$0xff]
    %v40 = vld [vmem:[#allocation3 + $0x18] sm:$0xff]
    %v41 = vld [vmem:[%s2] sm:$0xff]
    %v42 = vld [vmem:[%s2 + $0x8] sm:$0xff]
    %v43 = vld [vmem:[%s2 + $0x10] sm:$0xff]
    %v44 = vld [vmem:[%s2 + $0x18] sm:$0xff]
    %46 = vset.pattern.permute.xlu0 0
    %47 = vperm.xlu0 %46, %v41
    %v48 = vpop.permute.xlu0 %47
    %51 = vset.pattern.permute.xlu0 0
    %52 = vperm.xlu0 %51, %v42
    %v53 = vpop.permute.xlu0 %52
    %56 = vset.pattern.permute.xlu0 0
    %57 = vperm.xlu0 %56, %v43
    %v58 = vpop.permute.xlu0 %57
    %61 = vset.pattern.permute.xlu0 0
    %62 = vperm.xlu0 %61, %v44
    %v63 = vpop.permute.xlu0 %62
    %vm65 = vcmask 261120
    %v67 = vsel %vm65, %v37, 0
    %v70 = vsel %vm65, %v38, 0
    %v73 = vsel %vm65, %v39, 0
    %v76 = vsel %vm65, %v40, 0
    %78 = vmatprep.subr.mxu0 0.0
    %79 = vmatpush1.msra.mxu0 %v33
    %80 = vmatprep.subr.mxu0 0.0
    %81 = vmatpush1.msra.mxu0 %v34
    %82 = vmatprep.subr.mxu0 0.0
    %83 = vmatpush1.msra.mxu0 %v35
    %84 = vmatprep.subr.mxu0 0.0
    %85 = vmatpush1.msra.mxu0 %v36
    %86 = vmatprep.subr.mxu0 0.0
    %87 = vmatpush1.msra.mxu0 0.0
    %88 = vmatprep.subr.mxu0 0.0
    %89 = vmatpush1.msra.mxu0 0.0
    %90 = vmatprep.subr.mxu0 0.0
    %91 = vmatpush1.msra.mxu0 0.0
    %92 = vmatprep.subr.mxu0 0.0
    %93 = vmatpush1.msra.mxu0 0.0
    %94 = vmatprep.subr.mxu0 0.0
    %95 = vmatpush1.msra.mxu0 0.0
    %96 = vmatprep.subr.mxu0 0.0
    %97 = vmatpush1.msra.mxu0 0.0
    %98 = vmatprep.subr.mxu0 0.0
    %99 = vmatpush1.msra.mxu0 0.0
    %100 = vmatprep.subr.mxu0 0.0
    %101 = vmatpush1.msra.mxu0 0.0
    %102 = vmatprep.subr.mxu0 0.0
    %103 = vmatpush1.msra.mxu0 0.0
    %104 = vmatprep.subr.mxu0 0.0
    %105 = vmatpush1.msra.mxu0 0.0
    %106 = vmatprep.subr.mxu0 0.0
    %107 = vmatpush1.msra.mxu0 0.0
    %108 = vmatprep.subr.mxu0 0.0
    %109 = vmatpush1.msra.mxu0 0.0
    %110 = vmatprep.subr.mxu0 0.0
    %111 = vmatpush1.msra.mxu0 0.0
    %112 = vmatprep.subr.mxu0 0.0
    %113 = vmatpush1.msra.mxu0 0.0
    %114 = vmatprep.subr.mxu0 0.0
    %115 = vmatpush1.msra.mxu0 0.0
    %116 = vmatprep.subr.mxu0 0.0
    %117 = vmatpush1.msra.mxu0 0.0
    %118 = vmatprep.subr.mxu0 0.0
    %119 = vmatpush1.msra.mxu0 0.0
    %120 = vmatprep.subr.mxu0 0.0
    %121 = vmatpush1.msra.mxu0 0.0
    %122 = vmatprep.subr.mxu0 0.0
    %123 = vmatpush1.msra.mxu0 0.0
    %124 = vmatprep.subr.mxu0 0.0
    %125 = vmatpush1.msra.mxu0 0.0
    %126 = vmatprep.subr.mxu0 0.0
    %127 = vmatpush1.msra.mxu0 0.0
    %128 = vmatprep.subr.mxu0 0.0
    %129 = vmatpush1.msra.mxu0 0.0
    %130 = vmatprep.subr.mxu0 0.0
    %131 = vmatpush1.msra.mxu0 0.0
    %132 = vmatprep.subr.mxu0 0.0
    %133 = vmatpush1.msra.mxu0 0.0
    %134 = vmatprep.subr.mxu0 0.0
    %135 = vmatpush1.msra.mxu0 0.0
    %136 = vmatprep.subr.mxu0 0.0
    %137 = vmatpush1.msra.mxu0 0.0
    %138 = vmatprep.subr.mxu0 0.0
    %139 = vmatpush1.msra.mxu0 0.0
    %140 = vmatprep.subr.mxu0 0.0
    %141 = vmatpush1.msra.mxu0 0.0
    %142 = vmatprep.mubr.f32.mxu0 0.0
    %143 = vmatmul.mubr.f32.gmra.mrb[0].mxu0 %v67
    %v144 = vpop.f32.mrb[0].mxu0
    %v145 = vadd.f32 %v48, %v144
    %v146 = vpop.f32.mrb[0].mxu0
    %147 = vmatprep.mubr.f32.mxu0 0.0
    %148 = vmatmul.mubr.f32.gmra.mrb[0].mxu0 %v70
    %v149 = vpop.f32.mrb[0].mxu0
    %v150 = vadd.f32 %v53, %v149
    %v151 = vpop.f32.mrb[0].mxu0
    %152 = vmatprep.mubr.f32.mxu0 0.0
    %153 = vmatmul.mubr.f32.gmra.mrb[0].mxu0 %v73
    %v154 = vpop.f32.mrb[0].mxu0
    %v155 = vadd.f32 %v58, %v154
    %v156 = vpop.f32.mrb[0].mxu0
    %157 = vmatprep.mubr.f32.mxu0 0.0
    %158 = vmatmul.mubr.f32.gmra.mrb[0].mxu0 %v76
    %v159 = vpop.f32.mrb[0].mxu0
    %v160 = vadd.f32 %v63, %v159
    %v161 = vpop.f32.mrb[0].mxu0
    %162 = vdwg.mxu0
    %vm163 = vcmp.gt.f32.partialorder %v145, 0.0
    %vm164 = vcmp.gt.f32.partialorder %v150, 0.0
    %vm165 = vcmp.gt.f32.partialorder %v155, 0.0
    %vm166 = vcmp.gt.f32.partialorder %v160, 0.0
    %v167 = vmul.f32 %v145, 0.2
    %v168 = vmul.f32 %v150, 0.2
    %v169 = vmul.f32 %v155, 0.2
    %v170 = vmul.f32 %v160, 0.2
    %v171 = vsel %vm163, %v145, %v167
    %v172 = vsel %vm164, %v150, %v168
    %v173 = vsel %vm165, %v155, %v169
    %v174 = vsel %vm166, %v160, %v170
    %175 = vset.pattern.permute.xlu0 1
    %176 = vperm.xlu0 %175, %v41
    %v177 = vpop.permute.xlu0 %176
    %179 = vset.pattern.permute.xlu0 1
    %180 = vperm.xlu0 %179, %v42
    %v181 = vpop.permute.xlu0 %180
    %183 = vset.pattern.permute.xlu0 1
    %184 = vperm.xlu0 %183, %v43
    %v185 = vpop.permute.xlu0 %184
    %187 = vset.pattern.permute.xlu0 1
    %188 = vperm.xlu0 %187, %v44
    %v189 = vpop.permute.xlu0 %188
    %191 = vrot.lane.b32.xlu0 %v37, 96
    %v192 = vpop.permute.xlu0 %191
    %193 = vrot.lane.b32.xlu0 %v38, 96
    %v194 = vpop.permute.xlu0 %193
    %195 = vrot.lane.b32.xlu0 %v39, 96
    %v196 = vpop.permute.xlu0 %195
    %197 = vrot.lane.b32.xlu0 %v40, 96
    %v198 = vpop.permute.xlu0 %197
    %v199 = vsel %vm65, %v192, 0
    %v201 = vsel %vm65, %v194, 0
    %v203 = vsel %vm65, %v196, 0
    %v205 = vsel %vm65, %v198, 0
    %207 = vmatprep.subr.mxu0 0.0
    %208 = vmatpush1.msra.mxu0 %v171
    %209 = vmatprep.subr.mxu0 0.0
    %210 = vmatpush1.msra.mxu0 %v172
    %211 = vmatprep.subr.mxu0 0.0
    %212 = vmatpush1.msra.mxu0 %v173
    %213 = vmatprep.subr.mxu0 0.0
    %214 = vmatpush1.msra.mxu0 %v174
    %215 = vmatprep.subr.mxu0 0.0
    %216 = vmatpush1.msra.mxu0 0.0
    %217 = vmatprep.subr.mxu0 0.0
    %218 = vmatpush1.msra.mxu0 0.0
    %219 = vmatprep.subr.mxu0 0.0
    %220 = vmatpush1.msra.mxu0 0.0
    %221 = vmatprep.subr.mxu0 0.0
    %222 = vmatpush1.msra.mxu0 0.0
    %223 = vmatprep.subr.mxu0 0.0
    %224 = vmatpush1.msra.mxu0 0.0
    %225 = vmatprep.subr.mxu0 0.0
    %226 = vmatpush1.msra.mxu0 0.0
    %227 = vmatprep.subr.mxu0 0.0
    %228 = vmatpush1.msra.mxu0 0.0
    %229 = vmatprep.subr.mxu0 0.0
    %230 = vmatpush1.msra.mxu0 0.0
    %231 = vmatprep.subr.mxu0 0.0
    %232 = vmatpush1.msra.mxu0 0.0
    %233 = vmatprep.subr.mxu0 0.0
    %234 = vmatpush1.msra.mxu0 0.0
    %235 = vmatprep.subr.mxu0 0.0
    %236 = vmatpush1.msra.mxu0 0.0
    %237 = vmatprep.subr.mxu0 0.0
    %238 = vmatpush1.msra.mxu0 0.0
    %239 = vmatprep.subr.mxu0 0.0
    %240 = vmatpush1.msra.mxu0 0.0
    %241 = vmatprep.subr.mxu0 0.0
    %242 = vmatpush1.msra.mxu0 0.0
    %243 = vmatprep.subr.mxu0 0.0
    %244 = vmatpush1.msra.mxu0 0.0
    %245 = vmatprep.subr.mxu0 0.0
    %246 = vmatpush1.msra.mxu0 0.0
    %247 = vmatprep.subr.mxu0 0.0
    %248 = vmatpush1.msra.mxu0 0.0
    %249 = vmatprep.subr.mxu0 0.0
    %250 = vmatpush1.msra.mxu0 0.0
    %251 = vmatprep.subr.mxu0 0.0
    %252 = vmatpush1.msra.mxu0 0.0
    %253 = vmatprep.subr.mxu0 0.0
    %254 = vmatpush1.msra.mxu0 0.0
    %255 = vmatprep.subr.mxu0 0.0
    %256 = vmatpush1.msra.mxu0 0.0
    %257 = vmatprep.subr.mxu0 0.0
    %258 = vmatpush1.msra.mxu0 0.0
    %259 = vmatprep.subr.mxu0 0.0
    %260 = vmatpush1.msra.mxu0 0.0
    %261 = vmatprep.subr.mxu0 0.0
    %262 = vmatpush1.msra.mxu0 0.0
    %263 = vmatprep.subr.mxu0 0.0
    %264 = vmatpush1.msra.mxu0 0.0
    %265 = vmatprep.subr.mxu0 0.0
    %266 = vmatpush1.msra.mxu0 0.0
    %267 = vmatprep.subr.mxu0 0.0
    %268 = vmatpush1.msra.mxu0 0.0
    %269 = vmatprep.subr.mxu0 0.0
    %270 = vmatpush1.msra.mxu0 0.0
    %271 = vmatprep.mubr.f32.mxu0 0.0
    %272 = vmatmul.mubr.f32.gmra.mrb[0].mxu0 %v199
    %v273 = vpop.f32.mrb[0].mxu0
    %v274 = vadd.f32 %v177, %v273
    %v275 = vpop.f32.mrb[0].mxu0
    %276 = vmatprep.mubr.f32.mxu0 0.0
    %277 = vmatmul.mubr.f32.gmra.mrb[0].mxu0 %v201
    %v278 = vpop.f32.mrb[0].mxu0
    %v279 = vadd.f32 %v181, %v278
    %v280 = vpop.f32.mrb[0].mxu0
    %281 = vmatprep.mubr.f32.mxu0 0.0
    %282 = vmatmul.mubr.f32.gmra.mrb[0].mxu0 %v203
    %v283 = vpop.f32.mrb[0].mxu0
    %v284 = vadd.f32 %v185, %v283
    %v285 = vpop.f32.mrb[0].mxu0
    %286 = vmatprep.mubr.f32.mxu0 0.0
    %287 = vmatmul.mubr.f32.gmra.mrb[0].mxu0 %v205
    %v288 = vpop.f32.mrb[0].mxu0
    %v289 = vadd.f32 %v189, %v288
    %v290 = vpop.f32.mrb[0].mxu0
    %291 = vdwg.mxu0
    %vm292 = vcmp.gt.f32.partialorder %v274, 0.0
    %vm293 = vcmp.gt.f32.partialorder %v279, 0.0
    %vm294 = vcmp.gt.f32.partialorder %v284, 0.0
    %vm295 = vcmp.gt.f32.partialorder %v289, 0.0
    %v296 = vmul.f32 %v274, 0.2
    %v297 = vmul.f32 %v279, 0.2
    %v298 = vmul.f32 %v284, 0.2
    %v299 = vmul.f32 %v289, 0.2
    %v300 = vsel %vm292, %v274, %v296
    %v301 = vsel %vm293, %v279, %v297
    %v302 = vsel %vm294, %v284, %v298
    %v303 = vsel %vm295, %v289, %v299
    %304 = vset.pattern.permute.xlu0 2
    %305 = vperm.xlu0 %304, %v41
    %v306 = vpop.permute.xlu0 %305
    %308 = vset.pattern.permute.xlu0 2
    %309 = vperm.xlu0 %308, %v42
    %v310 = vpop.permute.xlu0 %309
    %312 = vset.pattern.permute.xlu0 2
    %313 = vperm.xlu0 %312, %v43
    %v314 = vpop.permute.xlu0 %313
    %316 = vset.pattern.permute.xlu0 2
    %317 = vperm.xlu0 %316, %v44
    %v318 = vpop.permute.xlu0 %317
    %v320 = vmul.f32 %v300, %v306
    %v321 = vmul.f32 %v301, %v310
    %v322 = vmul.f32 %v302, %v314
    %v323 = vmul.f32 %v303, %v318
    %v324 = vadd.f32 %v320, %v321
    %v325 = vadd.f32 %v324, %v322
    %v326 = vadd.f32 %v325, %v323
    %v327 = vrot.slane %v326, 4
    %v328 = vadd.f32 %v326, %v327
    %v329 = vrot.slane %v328, 2
    %v330 = vadd.f32 %v328, %v329
    %v331 = vrot.slane %v330, 1
    %v332 = vadd.f32 %v330, %v331
    %s333 = sld [smem:[#allocation2]]
    %v334 = vstv %s333
    %v335 = vadd.f32 %v332, %v334
    %336 = vst [vmem:[#allocation6] sm:$0x1] %v335
    // Predicated region
    $region22: #{tpu_custom_call.1} parent=1 // pred_check
      _
    $region23: #{tpu_custom_call.1} parent=1 // pred_check_branch
      %338 = sbr.rel (0) target = $region25
    $region24: #{tpu_custom_call.1} parent=1 // pred_region
      %s340 = ssub.s32 16, 16
      %341 = vsyncadd [#allocation5], %s340
      %s343 = sshll.u32 [#allocation6], 4
      %s344 = int_to_ptr.vmem [resolvable:$true] %s343
      %346 = dma.vmem_to_hbm [thread:$0]  %s344, 16, %s4, [#allocation5]
    $region25: #{tpu_custom_call.1} parent=1 // pred_fallthru
      _
    // Predicated region
    $region26: #{tpu_custom_call.1} parent=1 // pred_check
      _
    $region27: #{tpu_custom_call.1} parent=1 // pred_check_branch
      %348 = sbr.rel (0) target = $region29
    $region28: #{tpu_custom_call.1} parent=1 // pred_region
      %349 = dma.done [#allocation5], 16
    $region29: #{tpu_custom_call.1} parent=1 // pred_fallthru
      _
    %350 = vsyncpa [#allocation4], 1
    %351 = vsyncpa [#allocation5], 1

</llo_original>
